<compile_context>
chip_gen: v5e
topology: v5e:2x2
jax: 0.10.0
libtpu: 0.0.40
codegen_flags: <defaults>
</compile_context>

<pallas_src>
import functools

import jax
import jax.numpy as jnp
from jax import lax
from jax.experimental import pallas as pl
from jax.experimental.pallas import tpu as pltpu


# ----------------------------- input projection -----------------------------

def _in_proj_kernel(x_ref, w_ref, b_ref, o_ref):
    """(bm, E) @ (E, N) + (1, N); bf16 operands, f32 accumulation."""
    o_ref[...] = (jnp.dot(x_ref[...], w_ref[...],
                          preferred_element_type=jnp.float32) + b_ref[...])


def in_proj_pallas(x2d, w, b, *, block_m=512):
    """Hoisted input-gate projection, tiled over rows (keeps large documents
    within scoped VMEM on v7x); toy sizes fall back to a single full block."""
    M, E = x2d.shape
    N = w.shape[1]
    bm = block_m if (M > block_m and M % block_m == 0) else M
    return pl.pallas_call(
        _in_proj_kernel,
        out_shape=jax.ShapeDtypeStruct((M, N), jnp.float32),
        grid=(M // bm,),
        in_specs=[pl.BlockSpec((bm, E), lambda i: (i, 0)),
                  pl.BlockSpec((E, N), lambda i: (0, 0)),
                  pl.BlockSpec((1, N), lambda i: (0, 0))],
        out_specs=pl.BlockSpec((bm, N), lambda i: (i, 0)),
        compiler_params=pltpu.CompilerParams(
            dimension_semantics=("parallel",)),
    )(x2d.astype(jnp.bfloat16), w.astype(jnp.bfloat16), b)


# ------------------------ fused biGRU + attention kernel ---------------------

def _bigru_attn_kernel(x_ref, whh_ref, bhh_ref, h0_ref, awf_ref, awb_ref,
                       ab_ref, ap_ref,
                       out_ref, vec_ref, alpha_ref,
                       h_scr, buf_f, buf_b,
                       *, seg_len, hidden, use_tanh):
    """One SEGMENT per grid step: fused bidirectional GRU recurrence over the
    segment (a single (B,2H)@(2H,6H) recurrent matmul per time step covers both
    directions via a block-diagonal W_hh) followed by that segment's attention
    pooling.  The carried state h_scr (B, 2H) = [h_fwd | h_bwd] persists across
    grid steps, reproducing the PyTorch module's state chaining across
    sentences / notes.  Gate columns are interleaved [r_f r_b z_f z_b n_f n_b].
    """
    s = pl.program_id(0)
    H = hidden
    D = 2 * H
    B = x_ref.shape[1]

    @pl.when(s == 0)
    def _init():
        h_scr[...] = h0_ref[...]

    # Lane mask: even H-blocks of the 6H gate axis are forward-direction columns
    # (input at time t), odd blocks are backward (input at the mirrored time).
    # Hoisted out of the recurrence.
    col = lax.broadcasted_iota(jnp.int32, (B, 6 * H), 1)
    fwd_cols = (col // H) % 2 == 0

    whh = whh_ref[...]
    bhh = bhh_ref[...]

    def step(t, h):
        # Fused input gates: forward columns from x[t], backward from x[rev(t)].
        xg = jnp.where(fwd_cols, x_ref[t], x_ref[seg_len - 1 - t])      # (B, 6H)
        hh = jnp.dot(h.astype(jnp.bfloat16), whh,
                     preferred_element_type=jnp.float32) + bhh          # (B, 6H)
        r = jax.nn.sigmoid(xg[:, :D] + hh[:, :D])
        z = jax.nn.sigmoid(xg[:, D:2 * D] + hh[:, D:2 * D])
        n = jnp.tanh(xg[:, 2 * D:] + r * hh[:, 2 * D:])
        h_new = n + z * (h - n)                                         # (B, 2H)
        buf_f[t] = h_new[:, :H]                  # fwd output at position t
        buf_b[seg_len - 1 - t] = h_new[:, H:]    # bwd output at mirrored position
        return h_new

    h_scr[...] = lax.fori_loop(0, seg_len, step, h_scr[...], unroll=True)

    # ---- per-segment attention pooling (runs once per grid step) ----
    f_all = buf_f[...]                                                  # (W, B, H)
    b_all = buf_b[...]
    u = (jnp.dot(f_all.reshape(seg_len * B, H).astype(jnp.bfloat16), awf_ref[...],
                 preferred_element_type=jnp.float32)
         + jnp.dot(b_all.reshape(seg_len * B, H).astype(jnp.bfloat16), awb_ref[...],
                   preferred_element_type=jnp.float32)
         + ab_ref[...])                                                 # (W*B, 2H)
    if use_tanh:
        u = jnp.tanh(u)
    scores = jnp.sum(u.reshape(seg_len, B, D) * ap_ref[...],
                     axis=-1, keepdims=True)                            # (W, B, 1)
    m = jnp.max(scores, axis=0, keepdims=True)
    e = jnp.exp(scores - m)
    alpha = e * pl.reciprocal(jnp.sum(e, axis=0, keepdims=True), approx=True)
    vec_ref[0, :, :H] = jnp.sum(alpha * f_all, axis=0)                  # (B, H)
    vec_ref[0, :, H:] = jnp.sum(alpha * b_all, axis=0)
    alpha_ref[0] = alpha
    out_ref[:, :, :H] = f_all
    out_ref[:, :, H:] = b_all


def bigru_attn_pallas(x, h0, gp, attn_W, attn_b, attn_proj, *, n_seg, use_tanh):
    """Bidirectional GRU over `n_seg` chained segments + per-segment attention.

    x: (T, B, E) time-major with T = n_seg * seg_len; h0: (2, B, H) [fwd, bwd].
    Returns (seg_vecs (n_seg, B, 2H), alphas (n_seg, seg_len, B), out (T, B, 2H)).
    """
    T, B, E = x.shape
    assert T % n_seg == 0
    seg_len = T // n_seg
    H = gp["whh_f"].shape[0]
    D = 2 * H

    # Fuse the two directions' gate columns: [r_f r_b z_f z_b n_f n_b].
    def interleave(wf, wb):
        return jnp.concatenate(
            [wf[..., :H], wb[..., :H], wf[..., H:2 * H], wb[..., H:2 * H],
             wf[..., 2 * H:], wb[..., 2 * H:]], axis=-1)

    wih = interleave(gp["wih_f"], gp["wih_b"])                         # (E, 6H)
    bih = interleave(gp["bih_f"], gp["bih_b"])                         # (1, 6H)
    bhh = interleave(gp["bhh_f"], gp["bhh_b"])                         # (1, 6H)
    zero = jnp.zeros((H, H), gp["whh_f"].dtype)
    whh = jnp.concatenate([
        jnp.concatenate([gp["whh_f"][:, :H], zero, gp["whh_f"][:, H:2 * H], zero,
                         gp["whh_f"][:, 2 * H:], zero], axis=1),
        jnp.concatenate([zero, gp["whh_b"][:, :H], zero, gp["whh_b"][:, H:2 * H],
                         zero, gp["whh_b"][:, 2 * H:]], axis=1),
    ], axis=0)                                                          # (2H, 6H)
    h0_cat = jnp.concatenate([h0[0], h0[1]], axis=-1)                   # (B, 2H)

    # Hoisted input-gate projection for both directions / all gates at once.
    xp = in_proj_pallas(x.reshape(T * B, E), wih, bih).reshape(T, B, 6 * H)

    kernel = functools.partial(_bigru_attn_kernel, seg_len=seg_len,
                               hidden=H, use_tanh=use_tanh)

    out, seg_vecs, alphas = pl.pallas_call(
        kernel,
        out_shape=(jax.ShapeDtypeStruct((T, B, D), jnp.float32),
                   jax.ShapeDtypeStruct((n_seg, B, D), jnp.float32),
                   jax.ShapeDtypeStruct((n_seg, seg_len, B, 1), jnp.float32)),
        grid_spec=pltpu.PrefetchScalarGridSpec(
            num_scalar_prefetch=0,
            grid=(n_seg,),
            in_specs=[
                pl.BlockSpec((seg_len, B, 6 * H), lambda s: (s, 0, 0)),   # x proj
                pl.BlockSpec((D, 6 * H), lambda s: (0, 0)),               # whh fused
                pl.BlockSpec((1, 6 * H), lambda s: (0, 0)),               # bhh fused
                pl.BlockSpec((B, D), lambda s: (0, 0)),                   # h0 fused
                pl.BlockSpec((H, D), lambda s: (0, 0)),                   # attn W fwd
                pl.BlockSpec((H, D), lambda s: (0, 0)),                   # attn W bwd
                pl.BlockSpec((1, D), lambda s: (0, 0)),                   # attn bias
                pl.BlockSpec((1, D), lambda s: (0, 0)),                   # attn proj
            ],
            out_specs=[
                pl.BlockSpec((seg_len, B, D), lambda s: (s, 0, 0)),       # out
                pl.BlockSpec((1, B, D), lambda s: (s, 0, 0)),             # seg vecs
                pl.BlockSpec((1, seg_len, B, 1), lambda s: (s, 0, 0, 0)), # alphas
            ],
            scratch_shapes=[
                pltpu.VMEM((B, D), jnp.float32),            # carried [h_f | h_b]
                pltpu.VMEM((seg_len, B, H), jnp.float32),   # segment outputs fwd
                pltpu.VMEM((seg_len, B, H), jnp.float32),   # segment outputs bwd
            ],
        ),
        compiler_params=pltpu.CompilerParams(
            dimension_semantics=("arbitrary",)),   # state chains across segments
    )(xp, whh.astype(jnp.bfloat16), bhh, h0_cat,
      attn_W[:H].astype(jnp.bfloat16), attn_W[H:].astype(jnp.bfloat16),
      attn_b, attn_proj)

    return seg_vecs, alphas[..., 0], out


# ----------------------------- pure-JAX reference ---------------------------

def _gru_dir_ref(x, h0, wih, whh, bih, bhh):
    H = h0.shape[-1]

    def step(h, x_t):
        xi = x_t @ wih + bih
        hh = h @ whh + bhh
        r = jax.nn.sigmoid(xi[:, :H] + hh[:, :H])
        z = jax.nn.sigmoid(xi[:, H:2 * H] + hh[:, H:2 * H])
        n = jnp.tanh(xi[:, 2 * H:] + r * hh[:, 2 * H:])
        h_new = (1.0 - z) * n + z * h
        return h_new, h_new

    hT, outs = lax.scan(step, h0, x)
    return outs, hT


def bigru_attn_ref(x, h0, gp, attn_W, attn_b, attn_proj, *, n_seg, use_tanh):
    """Per-segment loop mirroring the PyTorch module (f32, no Pallas)."""
    T, B, _ = x.shape
    seg_len = T // n_seg
    state = h0
    seg_vecs, alphas, outs = [], [], []
    for s in range(n_seg):
        xs = x[s * seg_len:(s + 1) * seg_len]
        out_f, h_f = _gru_dir_ref(xs, state[0], gp["wih_f"], gp["whh_f"],
                                  gp["bih_f"], gp["bhh_f"])
        out_b_rev, h_b = _gru_dir_ref(xs[::-1], state[1], gp["wih_b"], gp["whh_b"],
                                      gp["bih_b"], gp["bhh_b"])
        out = jnp.concatenate([out_f, out_b_rev[::-1]], axis=-1)     # (seg_len,B,2H)
        state = jnp.stack([h_f, h_b], axis=0)
        u = jnp.einsum("tbd,de->tbe", out, attn_W) + attn_b
        if use_tanh:
            u = jnp.tanh(u)
        a = jnp.sum(u * attn_proj, axis=-1)                          # (seg_len, B)
        a = a - jnp.max(a, axis=0, keepdims=True)
        e = jnp.exp(a)
        alpha = e / jnp.sum(e, axis=0, keepdims=True)
        seg_vecs.append(jnp.sum(alpha[..., None] * out, axis=0))
        alphas.append(alpha)
        outs.append(out)
    return (jnp.stack(seg_vecs, 0), jnp.stack(alphas, 0),
            jnp.concatenate(outs, 0))


# ----------------------------- model glue -----------------------------------

def attention_note_rnn_forward(params, mini_batch, state_word, state_sent,
                               state_note, bigru_attn_fn):
    N, S, B, W = mini_batch.shape
    # Embedding gather + flatten (note, sent, word) into one chained, time-major
    # sequence (the PyTorch module carries state_word across sentences and notes).
    tokens = jnp.transpose(mini_batch, (0, 1, 3, 2)).reshape(N * S * W, B)
    emb = jnp.take(params["embedding"], tokens, axis=0)              # (N*S*W, B, E)

    # word level: no tanh on the attention squish (nonlinearity='').
    word_vecs, _, _ = bigru_attn_fn(
        emb, state_word, params["word_gru"], params["word_attn_W"],
        params["word_attn_b"], params["word_attn_proj"],
        n_seg=N * S, use_tanh=False)                                 # (N*S, B, 2Hw)

    sent_vecs, _, _ = bigru_attn_fn(
        word_vecs, state_sent, params["sent_gru"], params["sent_attn_W"],
        params["sent_attn_b"], params["sent_attn_proj"],
        n_seg=N, use_tanh=True)                                      # (N, B, 2Hs)

    note_vecs, note_alphas, out_note = bigru_attn_fn(
        sent_vecs, state_note, params["note_gru"], params["note_attn_W"],
        params["note_attn_b"], params["note_attn_proj"],
        n_seg=1, use_tanh=True)

    note_vec = note_vecs[0]                                          # (B, 2Hn)
    note_alpha = note_alphas[0].T                                    # (B, num_notes)
    # Final classifier: (B, 2Hn)@(2Hn, C) is too small for a dedicated kernel;
    # left to XLA per review feedback.
    final_map = note_vec @ params["final_W"] + params["final_b"][None]
    return out_note, note_alpha, note_vec, final_map


# ----------------------------- parameter init -------------------------------

def init_params(key, num_tokens, embed_size, Hw, Hs, Hn, n_classes):
    keys = iter(jax.random.split(key, 64))

    def u(shape, scale=0.1):
        return jax.random.uniform(next(keys), shape, jnp.float32, -scale, scale)

    def gru_params(in_dim, H):
        p = {}
        for d in ("f", "b"):
            p[f"wih_{d}"] = u((in_dim, 3 * H))   # gates [r, z, n] concatenated
            p[f"whh_{d}"] = u((H, 3 * H))
            p[f"bih_{d}"] = u((1, 3 * H))
            p[f"bhh_{d}"] = u((1, 3 * H))
        return p

    return {
        "embedding": u((num_tokens, embed_size), 1.0),
        "word_gru": gru_params(embed_size, Hw),
        "sent_gru": gru_params(2 * Hw, Hs),
        "note_gru": gru_params(2 * Hs, Hn),
        "word_attn_W": u((2 * Hw, 2 * Hw)),
        "word_attn_b": u((1, 2 * Hw)),
        "word_attn_proj": u((1, 2 * Hw)),
        "sent_attn_W": u((2 * Hs, 2 * Hs)),
        "sent_attn_b": u((1, 2 * Hs)),
        "sent_attn_proj": u((1, 2 * Hs)),
        "note_attn_W": u((2 * Hn, 2 * Hn)),
        "note_attn_b": u((1, 2 * Hn)),
        "note_attn_proj": u((1, 2 * Hn)),
        "final_W": u((2 * Hn, n_classes)),
        "final_b": u((n_classes,)),
    }


# ----------------------------------- main ------------------------------------

if __name__ == "__main__":
    batch = 2
    num_tokens = 50
    embed_size = 16
    Hw = Hs = Hn = 16
    n_classes = 2
    num_notes, num_sents, num_words = 3, 2, 5

    key = jax.random.PRNGKey(0)
    k_param, k_tok = jax.random.split(key)
    params = init_params(k_param, num_tokens, embed_size, Hw, Hs, Hn, n_classes)

    mini_batch = jax.random.randint(
        k_tok, (num_notes, num_sents, batch, num_words), 0, num_tokens,
        dtype=jnp.int32)
    state_word = jnp.zeros((2, batch, Hw), jnp.float32)
    state_sent = jnp.zeros((2, batch, Hs), jnp.float32)
    state_note = jnp.zeros((2, batch, Hn), jnp.float32)

    fwd = functools.partial(attention_note_rnn_forward, params, mini_batch,
                            state_word, state_sent, state_note)

    outs = jax.block_until_ready(fwd(bigru_attn_fn=bigru_attn_pallas))
    out_note, note_alpha, note_vec, final_map = outs

    # Pure-f32 JAX reference (same math, no Pallas, no bf16).
    ref = jax.block_until_ready(fwd(bigru_attn_fn=bigru_attn_ref))

    expected_shapes = [(num_notes, batch, 2 * Hn), (batch, num_notes),
                       (batch, 2 * Hn), (batch, n_classes)]
    for got, want, shp in zip(outs, ref, expected_shapes):
        assert got.shape == shp, (got.shape, shp)
        max_err = float(jnp.max(jnp.abs(got - want)))
        assert jnp.allclose(got, want, atol=2e-2, rtol=2e-2), max_err

    print("KERNEL_OK")
</pallas_src>

<mosaic_0001>
module attributes {stable_mosaic.version = 11 : i64} {
  func.func @_in_proj_kernel(%arg0: i32, %arg1: memref<60x16xbf16, #tpu.memory_space<vmem>>, %arg2: memref<16x96xbf16, #tpu.memory_space<vmem>>, %arg3: memref<1x96xf32, #tpu.memory_space<vmem>>, %arg4: memref<60x96xf32, #tpu.memory_space<vmem>>) attributes {dimension_semantics = [#tpu.dimension_semantics<parallel>], iteration_bounds = array<i64: 1>, scalar_prefetch = 0 : i64, scratch_operands = 0 : i64, tpu.core_type = #tpu.core_type<tc>, window_params = [{transform_indices = @transform_0, window_bounds = array<i64: 60, 16>}, {pipeline_mode = #tpu.pipeline_mode<synchronous>, transform_indices = @transform_1, window_bounds = array<i64: 16, 96>}, {pipeline_mode = #tpu.pipeline_mode<synchronous>, transform_indices = @transform_2, window_bounds = array<i64: 1, 96>}, {transform_indices = @transform_3, window_bounds = array<i64: 60, 96>}]} {
    %c0 = arith.constant 0 : index
    %c0_0 = arith.constant 0 : index
    %0 = vector.load %arg1[%c0, %c0_0] : memref<60x16xbf16, #tpu.memory_space<vmem>>, vector<60x16xbf16>
    %c0_1 = arith.constant 0 : index
    %c0_2 = arith.constant 0 : index
    %1 = vector.load %arg2[%c0_1, %c0_2] : memref<16x96xbf16, #tpu.memory_space<vmem>>, vector<16x96xbf16>
    %cst = arith.constant dense<0.000000e+00> : vector<60x96xf32>
    %2 = tpu.matmul %0, %1, %cst {dimension_numbers = #tpu.dot_dimension_numbers<[1], [0], [0], [1], [0, 0, 1, 1], [], []>} : vector<60x16xbf16>, vector<16x96xbf16>, vector<60x96xf32> -> vector<60x96xf32>
    %c0_3 = arith.constant 0 : index
    %c0_4 = arith.constant 0 : index
    %3 = vector.load %arg3[%c0_3, %c0_4] : memref<1x96xf32, #tpu.memory_space<vmem>>, vector<1x96xf32>
    %4 = vector.broadcast %3 : vector<1x96xf32> to vector<60x96xf32>
    %5 = arith.addf %2, %4 : vector<60x96xf32>
    %c0_5 = arith.constant 0 : index
    %c0_6 = arith.constant 0 : index
    %6 = vector.load %arg4[%c0_5, %c0_6] : memref<60x96xf32, #tpu.memory_space<vmem>>, vector<60x96xf32>
    tpu.vector_store %arg4[%c0_5, %c0_6], %5 {strides = array<i32>} : memref<60x96xf32, #tpu.memory_space<vmem>>, vector<60x96xf32>,
    return
  }
  func.func @transform_0(%arg0: i32) -> (i32, i32) {
    %c0_i32 = arith.constant 0 : i32
    %c0_i32_0 = arith.constant 0 : i32
    return %arg0, %c0_i32 : i32, i32
  }
  func.func @transform_1(%arg0: i32) -> (i32, i32) {
    %c0_i32 = arith.constant 0 : i32
    %c0_i32_0 = arith.constant 0 : i32
    %c0_i32_1 = arith.constant 0 : i32
    return %c0_i32, %c0_i32_0 : i32, i32
  }
  func.func @transform_2(%arg0: i32) -> (i32, i32) {
    %c0_i32 = arith.constant 0 : i32
    %c0_i32_0 = arith.constant 0 : i32
    %c0_i32_1 = arith.constant 0 : i32
    return %c0_i32, %c0_i32_0 : i32, i32
  }
  func.func @transform_3(%arg0: i32) -> (i32, i32) {
    %c0_i32 = arith.constant 0 : i32
    %c0_i32_0 = arith.constant 0 : i32
    return %arg0, %c0_i32 : i32, i32
  }
}

</mosaic_0001>

<llo_original>
// kernel: tpu_custom_call.1
$region0: #{tpu_custom_call.1}
  #allocation0 [shape = 'u32[]', space=smem, size = 0x4, offset = 0x4, fixed_abs, tag = 'smem constant byte address 0x4 - core index']
  #allocation1 [shape = 'u32[72,128]{1,0:T(1,128)}', space=vmem, size = 0x9000, scoped, tag = 'internal scratch']
  %s0 = inlined_call_operand.vmem [shape: bf16[60,16], index: 0, kind: input, shape index: {}]
  %s1 = inlined_call_operand.vmem [shape: bf16[16,96], index: 1, kind: input, shape index: {}]
  %s2 = inlined_call_operand.vmem [shape: f32[1,96], index: 2, kind: input, shape index: {}]
  %s3 = inlined_call_operand.hbm [shape: f32[60,96], index: 3, kind: output, shape index: {}]
  %s4 = sld [smem:[#allocation0]]
  $region22: #{tpu_custom_call.1} parent=0
    _
  %s6 = ssub.s32 1, %s4
  %s7 = scalar_select 0, %s6, %s4
  $region1: #{tpu_custom_call.1} parent=0
    #allocation2 [shape = 'u8[32768]{0}', space=vmem, size = 0x8000, scoped, tag = 'output window, operand 0, single buffered']
    #allocation3 [shape = 's32[1]{0}', space=sflag, size = 0x4, scoped, tag = 'scoped memory for tpu_custom_call.1']
    %8 = vsyncpa [#allocation3], 0
    // Predicated region
    $region2: #{tpu_custom_call.1} parent=1 // pred_check
      _
    $region3: #{tpu_custom_call.1} parent=1 // pred_check_branch
      %10 = sbr.rel (0) target = $region5
    $region4: #{tpu_custom_call.1} parent=1 // pred_region
      _
    $region5: #{tpu_custom_call.1} parent=1 // pred_fallthru
      _
    // Predicated region
    $region6: #{tpu_custom_call.1} parent=1 // pred_check
      _
    $region7: #{tpu_custom_call.1} parent=1 // pred_check_branch
      %12 = sbr.rel (0) target = $region9
    $region8: #{tpu_custom_call.1} parent=1 // pred_region
      _
    $region9: #{tpu_custom_call.1} parent=1 // pred_fallthru
      _
    // Predicated region
    $region10: #{tpu_custom_call.1} parent=1 // pred_check
      _
    $region11: #{tpu_custom_call.1} parent=1 // pred_check_branch
      %14 = sbr.rel (0) target = $region13
    $region12: #{tpu_custom_call.1} parent=1 // pred_region
      _
    $region13: #{tpu_custom_call.1} parent=1 // pred_fallthru
      _
    %v16 = vld [vmem:[%s0] sm:$0xf]
    %v17 = vld [vmem:[%s0 + $0x4] sm:$0xf]
    %v18 = vld [vmem:[%s0 + $0x8] sm:$0xf]
    %v19 = vld [vmem:[%s0 + $0xc] sm:$0xf]
    %v20 = vld [vmem:[%s0 + $0x10] sm:$0xf]
    %v21 = vld [vmem:[%s0 + $0x14] sm:$0xf]
    %v22 = vld [vmem:[%s0 + $0x18] sm:$0xf]
    %v23 = vld [vmem:[%s0 + $0x1c] sm:$0x3]
    %v24 = vld [vmem:[%s1] sm:$0xf]
    %v25 = vld [vmem:[%s1 + $0x4] sm:$0xf]
    %v26 = vld [vmem:[%s2] sm:$0x1]
    %v28 = vperm.slane %v26, 0
    %v38 = vunpack.c.l.b16 %v16
    %v39 = vunpack.c.l.b16 %v17
    %v40 = vunpack.c.l.b16 %v18
    %v41 = vunpack.c.l.b16 %v19
    %v42 = vunpack.c.l.b16 %v20
    %v43 = vunpack.c.l.b16 %v21
    %v44 = vunpack.c.l.b16 %v22
    %v45 = vunpack.c.l.b16 %v23
    %v46 = vpack.c.b16 %v39, %v38
    %v47 = vpack.c.b16 %v41, %v40
    %v48 = vpack.c.b16 %v43, %v42
    %v49 = vpack.c.b16 %v45, %v44
    %v52 = vunpack.c.l.b16 %v24
    %v53 = vunpack.c.l.b16 %v25
    %v54 = vpack.c.b16 %v53, %v52
    %vm56 = vcmask 130048
    %v58 = vsel %vm56, %v46, 0
    %v61 = vsel %vm56, %v47, 0
    %v64 = vsel %vm56, %v48, 0
    %v67 = vsel %vm56, %v49, 0
    %69 = vmatpush.bf16.msra.mxu0 0
    %70 = vmatpush.bf16.msra.mxu0 0
    %71 = vmatpush.bf16.msra.mxu0 0
    %72 = vmatpush.bf16.msra.mxu0 0
    %73 = vmatpush.bf16.msra.mxu0 0
    %74 = vmatpush.bf16.msra.mxu0 0
    %75 = vmatpush.bf16.msra.mxu0 0
    %76 = vmatpush.bf16.msra.mxu0 %v54
    %77 = vmatmul.bf16.gmra.mxu0 %v58
    %v78 = vpop.f32.mrf.mxu0
    %v79 = vadd.f32 %v28, %v78
    %v80 = vpop.f32.mrf.mxu0
    %v81 = vadd.f32 %v28, %v80
    %82 = vmatmul.bf16.gmra.mxu0 %v61
    %v83 = vpop.f32.mrf.mxu0
    %v84 = vadd.f32 %v28, %v83
    %v85 = vpop.f32.mrf.mxu0
    %v86 = vadd.f32 %v28, %v85
    %87 = vmatmul.bf16.gmra.mxu0 %v64
    %v88 = vpop.f32.mrf.mxu0
    %v89 = vadd.f32 %v28, %v88
    %v90 = vpop.f32.mrf.mxu0
    %v91 = vadd.f32 %v28, %v90
    %92 = vmatmul.bf16.gmra.mxu0 %v67
    %v93 = vpop.f32.mrf.mxu0
    %v94 = vadd.f32 %v28, %v93
    %v95 = vpop.f32.mrf.mxu0
    %v96 = vadd.f32 %v28, %v95
    %97 = vdwg.mxu0
    %vm98 = vcmask 785408
    %99 = vst.msk [vmem:[#allocation2] sm:$0xff] %vm98, %v79
    %100 = vst.msk [vmem:[#allocation2 + $0x8] sm:$0xff] %vm98, %v81
    %101 = vst.msk [vmem:[#allocation2 + $0x10] sm:$0xff] %vm98, %v84
    %102 = vst.msk [vmem:[#allocation2 + $0x18] sm:$0xff] %vm98, %v86
    %103 = vst.msk [vmem:[#allocation2 + $0x20] sm:$0xff] %vm98, %v89
    %104 = vst.msk [vmem:[#allocation2 + $0x28] sm:$0xff] %vm98, %v91
    %105 = vst.msk [vmem:[#allocation2 + $0x30] sm:$0xff] %vm98, %v94
    %vm106 = vcmask 781312
    %107 = vst.msk [vmem:[#allocation2 + $0x38] sm:$0xf] %vm106, %v96
    // Predicated region
    $region14: #{tpu_custom_call.1} parent=1 // pred_check
      _
    $region15: #{tpu_custom_call.1} parent=1 // pred_check_branch
      %109 = sbr.rel (0) target = $region17
    $region16: #{tpu_custom_call.1} parent=1 // pred_region
      %111 = vsyncadd [#allocation3], 0
      %s112 = sshll.u32 [#allocation2], 4
      %s113 = int_to_ptr.vmem [resolvable:$true] %s112
      %s114 = sshll.u32 %s3, 4
      %s115 = int_to_ptr.hbm [resolvable:$true] %s114
      %120 = dma.vmem_to_hbm [thread:$0]  %s113, 1024, %s115, [#allocation3], 128, 128, 8
    $region17: #{tpu_custom_call.1} parent=1 // pred_fallthru
      _
    // Predicated region
    $region18: #{tpu_custom_call.1} parent=1 // pred_check
      _
    $region19: #{tpu_custom_call.1} parent=1 // pred_check_branch
      %122 = sbr.rel (0) target = $region21
    $region20: #{tpu_custom_call.1} parent=1 // pred_region
      %124 = dma.done [#allocation3], 1024
    $region21: #{tpu_custom_call.1} parent=1 // pred_fallthru
      _
    %125 = vsyncpa [#allocation3], 1

</llo_original>
